<compile_context>
chip_gen: v6e
topology: v6e:2x2x1
jax: 0.10.0
libtpu: 0.0.40
codegen_flags: <defaults>
</compile_context>

<pallas_src>
import functools
import numpy as np
import jax
import jax.numpy as jnp
from jax.experimental import pallas as pl
from jax.experimental.pallas import tpu as pltpu


# ------------------------------ Pallas kernel ------------------------------ #
def shuffle_unit_add_kernel(x_ref, w1_ref, b1_ref, wdw_ref, msk_ref,
                            w2_ref, b3_ref, o_ref, *, W):
    """One image: x_ref (Cin, H*W) -> o_ref (Cout, H*W)."""
    _, HW = x_ref.shape

    x = x_ref[...]                                                    # (Cin, HW)

    # grouped 1x1 conv #1 (block-diagonal dense matmul; BN1 scale pre-folded
    # into the rows of w1) + BN1 bias + ReLU
    h = jnp.dot(w1_ref[...], x, preferred_element_type=jnp.float32)   # (P, HW)
    h = jnp.maximum(h + b1_ref[...], 0.0)

    # 3x3 depthwise conv, stride 1, pad 1.  Spatial is flattened on the lane
    # axis, so tap (di, dj) is a lane roll by di*W + dj plus a border mask.
    # channel_shuffle + BN2 scale are pre-folded into wdw_ref; the BN2 bias was
    # pushed through conv2 into b3_ref.
    wdw = wdw_ref[...]                                                # (9, P, 1)
    msk = msk_ref[...]                                                # (9, 1, HW)
    acc = h * wdw[4]                                                  # center tap (0, 0): no shift, no mask
    for k in range(9):
        if k == 4:
            continue
        di, dj = k // 3 - 1, k % 3 - 1
        off = di * W + dj
        # rolled[:, s] = h[:, (s + off) % HW]; wrap-around positions are masked.
        rolled = pltpu.roll(h, shift=(-off) % HW, axis=1)
        acc = acc + rolled * wdw[k] * msk[k]

    # grouped 1x1 conv #2 (BN3 scale folded into rows of w2; BN2+BN3 biases in
    # b3) + residual add + ReLU.  Store is lane-dense (HW lanes).
    o = jnp.dot(w2_ref[...], acc, preferred_element_type=jnp.float32)  # (Cout, HW)
    o_ref[...] = jnp.maximum(o + b3_ref[...] + x, 0.0)


# ------------------------------ glue / params ------------------------------ #
def grouped_1x1_to_dense(wg, in_ch, out_ch, groups):
    """PyTorch grouped conv1x1 weight (out_ch, in_ch//groups) -> dense (in_ch, out_ch)."""
    in_per_g = in_ch // groups
    out_per_g = out_ch // groups
    Wd = np.zeros((in_ch, out_ch), np.float32)
    for g in range(groups):
        blk = np.asarray(wg)[g * out_per_g:(g + 1) * out_per_g, :]    # (out_per_g, in_per_g)
        Wd[g * in_per_g:(g + 1) * in_per_g,
           g * out_per_g:(g + 1) * out_per_g] = blk.T
    return Wd


def bn_fold(gamma, beta, mean, var, eps=1e-5):
    gamma, beta, mean, var = map(np.asarray, (gamma, beta, mean, var))
    scale = gamma / np.sqrt(var + eps)
    shift = beta - mean * scale
    return scale, shift


def make_tap_masks(H, W):
    """(9, 1, H*W) border-validity masks for the 3x3 depthwise taps."""
    s = np.arange(H * W)
    i, j = s // W, s % W
    masks = np.zeros((9, 1, H * W), np.float32)
    for k in range(9):
        di, dj = k // 3 - 1, k % 3 - 1
        valid = (i + di >= 0) & (i + di < H) & (j + dj >= 0) & (j + dj < W)
        masks[k, 0, :] = valid.astype(np.float32)
    return jnp.asarray(masks)


def make_params(key, in_planes, out_planes, groups):
    planes = in_planes // 4
    ks = jax.random.split(key, 15)

    # raw (PyTorch-shaped) parameters, deterministic
    w1g = 0.1 * jax.random.normal(ks[0], (planes, in_planes // groups), jnp.float32)
    wdw = 0.1 * jax.random.normal(ks[1], (planes, 3, 3), jnp.float32)
    w2g = 0.1 * jax.random.normal(ks[2], (out_planes, planes // groups), jnp.float32)

    def bn(kg, kb, km, kv, n):
        gamma = 1.0 + 0.1 * jax.random.normal(kg, (n,), jnp.float32)
        beta = 0.1 * jax.random.normal(kb, (n,), jnp.float32)
        mean = 0.1 * jax.random.normal(km, (n,), jnp.float32)
        var = 0.5 + jnp.abs(jax.random.normal(kv, (n,), jnp.float32))
        return gamma, beta, mean, var

    bn1 = bn(ks[3], ks[4], ks[5], ks[6], planes)
    bn2 = bn(ks[7], ks[8], ks[9], ks[10], planes)
    bn3 = bn(ks[11], ks[12], ks[13], ks[14], out_planes)

    raw = dict(w1g=w1g, wdw=wdw, w2g=w2g, bn1=bn1, bn2=bn2, bn3=bn3,
               groups=groups, in_planes=in_planes, out_planes=out_planes, planes=planes)

    # ---- fold into kernel-ready (channels-on-sublanes, H*W-on-lanes) form ----
    cpg = planes // groups
    perm = np.arange(planes).reshape(groups, cpg).T.reshape(-1)   # shuffled[c'] = h[perm[c']]
    perm_inv = np.argsort(perm)

    w1_dense = grouped_1x1_to_dense(w1g, in_planes, planes, groups)       # (Cin, P)
    w2_dense = grouped_1x1_to_dense(w2g, planes, out_planes, groups)      # (P, Cout)

    s1, b1 = bn_fold(*bn1)
    s2, b2 = bn_fold(*bn2)
    s3, b3 = bn_fold(*bn3)

    # conv1: BN1 scale folded into the rows of w1^T
    w1s = (w1_dense.T * s1[:, None]).astype(np.float32)                   # (P, Cin)
    b1k = b1[:, None].astype(np.float32)                                  # (P, 1)

    # depthwise: channel_shuffle (perm_inv) + BN2 scale folded into tap weights
    wdw9 = np.asarray(wdw).reshape(planes, 9)[perm_inv]                   # (P, 9)
    s2p, b2p = s2[perm_inv], b2[perm_inv]
    wdw_k = (wdw9 * s2p[:, None]).T.reshape(9, planes, 1).astype(np.float32)   # (9, P, 1)

    # conv2: shuffled input-channel order + BN3 scale folded into rows of w2^T;
    # BN2 bias pushed through conv2 and merged with BN3 bias.
    w2T = w2_dense[perm_inv].T                                            # (Cout, P)
    w2s = (w2T * s3[:, None]).astype(np.float32)                          # (Cout, P)
    b3e = (s3 * (w2T @ b2p) + b3)[:, None].astype(np.float32)             # (Cout, 1)

    folded = tuple(jnp.asarray(a) for a in (w1s, b1k, wdw_k, w2s, b3e))
    return raw, folded


# ------------------------------ Pallas wrapper ------------------------------ #
def shuffle_unit_add(x_nchw, folded):
    N, Cin, H, W = x_nchw.shape
    HW = H * W
    w1s, b1k, wdw_k, w2s, b3e = folded
    P = w1s.shape[0]
    Cout = w2s.shape[0]
    masks = make_tap_masks(H, W)                                     # (9, 1, HW)

    # Free reshape (no transpose, no extra HBM pass): NCHW -> (N, C, H*W)
    x2 = x_nchw.reshape(N, Cin, HW).astype(jnp.float32)

    def const(shape):
        return pl.BlockSpec(shape, lambda n, _nd=len(shape): (0,) * _nd)

    out = pl.pallas_call(
        functools.partial(shuffle_unit_add_kernel, W=W),
        out_shape=jax.ShapeDtypeStruct((N, Cout, HW), jnp.float32),
        grid=(N,),
        in_specs=[pl.BlockSpec((None, Cin, HW), lambda n: (n, 0, 0)),
                  const((P, Cin)), const((P, 1)),
                  const((9, P, 1)), const((9, 1, HW)),
                  const((Cout, P)), const((Cout, 1))],
        out_specs=pl.BlockSpec((None, Cout, HW), lambda n: (n, 0, 0)),
        compiler_params=pltpu.CompilerParams(dimension_semantics=("parallel",)),
    )(x2, w1s, b1k, wdw_k, masks, w2s, b3e)

    return out.reshape(N, Cout, H, W)                                # free reshape back to NCHW


# ------------------------------ pure-JAX reference ------------------------------ #
def reference_forward(x_nchw, raw):
    x = jnp.transpose(x_nchw, (0, 2, 3, 1)).astype(jnp.float32)      # NHWC
    N, H, W, Cin = x.shape
    groups = raw["groups"]
    planes = raw["planes"]
    out_planes = raw["out_planes"]

    w1_dense = jnp.asarray(grouped_1x1_to_dense(raw["w1g"], Cin, planes, groups))
    w2_dense = jnp.asarray(grouped_1x1_to_dense(raw["w2g"], planes, out_planes, groups))
    s1, b1 = bn_fold(*raw["bn1"])
    s2, b2 = bn_fold(*raw["bn2"])
    s3, b3 = bn_fold(*raw["bn3"])
    wdw = raw["wdw"]                                                 # (P, 3, 3)

    h = jnp.einsum('nhwc,cp->nhwp', x, w1_dense)
    h = jnp.maximum(h * s1 + b1, 0.0)

    # channel shuffle (channels-last version of the PyTorch NCHW shuffle)
    cpg = planes // groups
    h = h.reshape(N, H, W, groups, cpg).transpose(0, 1, 2, 4, 3).reshape(N, H, W, planes)

    hp = jnp.pad(h, ((0, 0), (1, 1), (1, 1), (0, 0)))
    acc = jnp.zeros((N, H, W, planes), jnp.float32)
    for di in range(3):
        for dj in range(3):
            acc = acc + hp[:, di:di + H, dj:dj + W, :] * wdw[:, di, dj]
    d = acc * s2 + b2

    o = jnp.einsum('nhwp,pq->nhwq', d, w2_dense)
    o = o * s3 + b3
    out = jnp.maximum(o + x, 0.0)
    return jnp.transpose(out, (0, 3, 1, 2))


# ------------------------------ main ------------------------------ #
if __name__ == "__main__":
    key = jax.random.PRNGKey(0)
    k_x, k_p = jax.random.split(key)

    # combine='add' requires out_planes == in_planes (residual add)
    N, in_planes, H, W = 2, 32, 16, 16
    out_planes, groups = 32, 4

    x = jax.random.normal(k_x, (N, in_planes, H, W), jnp.float32)
    raw, folded = make_params(k_p, in_planes, out_planes, groups)

    y = jax.block_until_ready(shuffle_unit_add(x, folded))

    y_ref = jax.block_until_ready(reference_forward(x, raw))
    err = float(jnp.max(jnp.abs(y - y_ref)))
    if err > 1e-2:
        raise AssertionError(f"Pallas kernel mismatch vs reference: max abs err = {err}")

    print("KERNEL_OK")
</pallas_src>

<mosaic_0001>
module attributes {stable_mosaic.version = 11 : i64} {
  func.func @shuffle_unit_add_kernel(%arg0: i32, %arg1: memref<1x32x256xf32, #tpu.memory_space<vmem>>, %arg2: memref<8x32xf32, #tpu.memory_space<vmem>>, %arg3: memref<8x1xf32, #tpu.memory_space<vmem>>, %arg4: memref<9x8x1xf32, #tpu.memory_space<vmem>>, %arg5: memref<9x1x256xf32, #tpu.memory_space<vmem>>, %arg6: memref<32x8xf32, #tpu.memory_space<vmem>>, %arg7: memref<32x1xf32, #tpu.memory_space<vmem>>, %arg8: memref<1x32x256xf32, #tpu.memory_space<vmem>>) attributes {dimension_semantics = [#tpu.dimension_semantics<parallel>], iteration_bounds = array<i64: 2>, scalar_prefetch = 0 : i64, scratch_operands = 0 : i64, tpu.core_type = #tpu.core_type<tc>, window_params = [{transform_indices = @transform_0, window_bounds = array<i64: 1, 32, 256>}, {pipeline_mode = #tpu.pipeline_mode<synchronous>, transform_indices = @transform_1, window_bounds = array<i64: 8, 32>}, {pipeline_mode = #tpu.pipeline_mode<synchronous>, transform_indices = @transform_2, window_bounds = array<i64: 8, 1>}, {pipeline_mode = #tpu.pipeline_mode<synchronous>, transform_indices = @transform_3, window_bounds = array<i64: 9, 8, 1>}, {pipeline_mode = #tpu.pipeline_mode<synchronous>, transform_indices = @transform_4, window_bounds = array<i64: 9, 1, 256>}, {pipeline_mode = #tpu.pipeline_mode<synchronous>, transform_indices = @transform_5, window_bounds = array<i64: 32, 8>}, {pipeline_mode = #tpu.pipeline_mode<synchronous>, transform_indices = @transform_6, window_bounds = array<i64: 32, 1>}, {transform_indices = @transform_7, window_bounds = array<i64: 1, 32, 256>}]} {
    %c0 = arith.constant 0 : index
    %c0_0 = arith.constant 0 : index
    %c0_1 = arith.constant 0 : index
    %0 = vector.load %arg1[%c0, %c0_0, %c0_1] : memref<1x32x256xf32, #tpu.memory_space<vmem>>, vector<1x32x256xf32>
    %1 = vector.shape_cast %0 : vector<1x32x256xf32> to vector<32x256xf32>
    %c0_2 = arith.constant 0 : index
    %c0_3 = arith.constant 0 : index
    %2 = vector.load %arg2[%c0_2, %c0_3] : memref<8x32xf32, #tpu.memory_space<vmem>>, vector<8x32xf32>
    %cst = arith.constant dense<0.000000e+00> : vector<8x256xf32>
    %3 = tpu.matmul %2, %1, %cst {dimension_numbers = #tpu.dot_dimension_numbers<[1], [0], [0], [1], [0, 0, 1, 1], [], []>} : vector<8x32xf32>, vector<32x256xf32>, vector<8x256xf32> -> vector<8x256xf32>
    %c0_4 = arith.constant 0 : index
    %c0_5 = arith.constant 0 : index
    %4 = vector.load %arg3[%c0_4, %c0_5] : memref<8x1xf32, #tpu.memory_space<vmem>>, vector<8x1xf32>
    %5 = vector.broadcast %4 : vector<8x1xf32> to vector<8x256xf32>
    %6 = arith.addf %3, %5 : vector<8x256xf32>
    %cst_6 = arith.constant 0.000000e+00 : f32
    %7 = vector.broadcast %cst_6 : f32 to vector<8x256xf32>
    %8 = arith.maximumf %6, %7 : vector<8x256xf32>
    %c0_7 = arith.constant 0 : index
    %c0_8 = arith.constant 0 : index
    %c0_9 = arith.constant 0 : index
    %9 = vector.load %arg4[%c0_7, %c0_8, %c0_9] : memref<9x8x1xf32, #tpu.memory_space<vmem>>, vector<9x8x1xf32>
    %c0_10 = arith.constant 0 : index
    %c0_11 = arith.constant 0 : index
    %c0_12 = arith.constant 0 : index
    %10 = vector.load %arg5[%c0_10, %c0_11, %c0_12] : memref<9x1x256xf32, #tpu.memory_space<vmem>>, vector<9x1x256xf32>
    %11 = vector.extract_strided_slice %9 {offsets = [4, 0, 0], sizes = [1, 8, 1], strides = [1, 1, 1]} : vector<9x8x1xf32> to vector<1x8x1xf32>
    %12 = vector.shape_cast %11 : vector<1x8x1xf32> to vector<8x1xf32>
    %13 = vector.broadcast %12 : vector<8x1xf32> to vector<8x256xf32>
    %14 = arith.mulf %8, %13 : vector<8x256xf32>
    %c17_i32 = arith.constant 17 : i32
    %15 = tpu.dynamic_rotate %8 by %c17_i32 dim 1 : vector<8x256xf32>, i32 -> vector<8x256xf32>
    %16 = vector.extract_strided_slice %9 {offsets = [0, 0, 0], sizes = [1, 8, 1], strides = [1, 1, 1]} : vector<9x8x1xf32> to vector<1x8x1xf32>
    %17 = vector.shape_cast %16 : vector<1x8x1xf32> to vector<8x1xf32>
    %18 = vector.broadcast %17 : vector<8x1xf32> to vector<8x256xf32>
    %19 = arith.mulf %15, %18 : vector<8x256xf32>
    %20 = vector.extract_strided_slice %10 {offsets = [0, 0, 0], sizes = [1, 1, 256], strides = [1, 1, 1]} : vector<9x1x256xf32> to vector<1x1x256xf32>
    %21 = vector.shape_cast %20 : vector<1x1x256xf32> to vector<1x256xf32>
    %22 = vector.broadcast %21 : vector<1x256xf32> to vector<8x256xf32>
    %23 = arith.mulf %19, %22 : vector<8x256xf32>
    %24 = arith.addf %14, %23 : vector<8x256xf32>
    %c16_i32 = arith.constant 16 : i32
    %25 = tpu.dynamic_rotate %8 by %c16_i32 dim 1 : vector<8x256xf32>, i32 -> vector<8x256xf32>
    %26 = vector.extract_strided_slice %9 {offsets = [1, 0, 0], sizes = [1, 8, 1], strides = [1, 1, 1]} : vector<9x8x1xf32> to vector<1x8x1xf32>
    %27 = vector.shape_cast %26 : vector<1x8x1xf32> to vector<8x1xf32>
    %28 = vector.broadcast %27 : vector<8x1xf32> to vector<8x256xf32>
    %29 = arith.mulf %25, %28 : vector<8x256xf32>
    %30 = vector.extract_strided_slice %10 {offsets = [1, 0, 0], sizes = [1, 1, 256], strides = [1, 1, 1]} : vector<9x1x256xf32> to vector<1x1x256xf32>
    %31 = vector.shape_cast %30 : vector<1x1x256xf32> to vector<1x256xf32>
    %32 = vector.broadcast %31 : vector<1x256xf32> to vector<8x256xf32>
    %33 = arith.mulf %29, %32 : vector<8x256xf32>
    %34 = arith.addf %24, %33 : vector<8x256xf32>
    %c15_i32 = arith.constant 15 : i32
    %35 = tpu.dynamic_rotate %8 by %c15_i32 dim 1 : vector<8x256xf32>, i32 -> vector<8x256xf32>
    %36 = vector.extract_strided_slice %9 {offsets = [2, 0, 0], sizes = [1, 8, 1], strides = [1, 1, 1]} : vector<9x8x1xf32> to vector<1x8x1xf32>
    %37 = vector.shape_cast %36 : vector<1x8x1xf32> to vector<8x1xf32>
    %38 = vector.broadcast %37 : vector<8x1xf32> to vector<8x256xf32>
    %39 = arith.mulf %35, %38 : vector<8x256xf32>
    %40 = vector.extract_strided_slice %10 {offsets = [2, 0, 0], sizes = [1, 1, 256], strides = [1, 1, 1]} : vector<9x1x256xf32> to vector<1x1x256xf32>
    %41 = vector.shape_cast %40 : vector<1x1x256xf32> to vector<1x256xf32>
    %42 = vector.broadcast %41 : vector<1x256xf32> to vector<8x256xf32>
    %43 = arith.mulf %39, %42 : vector<8x256xf32>
    %44 = arith.addf %34, %43 : vector<8x256xf32>
    %c1_i32 = arith.constant 1 : i32
    %45 = tpu.dynamic_rotate %8 by %c1_i32 dim 1 : vector<8x256xf32>, i32 -> vector<8x256xf32>
    %46 = vector.extract_strided_slice %9 {offsets = [3, 0, 0], sizes = [1, 8, 1], strides = [1, 1, 1]} : vector<9x8x1xf32> to vector<1x8x1xf32>
    %47 = vector.shape_cast %46 : vector<1x8x1xf32> to vector<8x1xf32>
    %48 = vector.broadcast %47 : vector<8x1xf32> to vector<8x256xf32>
    %49 = arith.mulf %45, %48 : vector<8x256xf32>
    %50 = vector.extract_strided_slice %10 {offsets = [3, 0, 0], sizes = [1, 1, 256], strides = [1, 1, 1]} : vector<9x1x256xf32> to vector<1x1x256xf32>
    %51 = vector.shape_cast %50 : vector<1x1x256xf32> to vector<1x256xf32>
    %52 = vector.broadcast %51 : vector<1x256xf32> to vector<8x256xf32>
    %53 = arith.mulf %49, %52 : vector<8x256xf32>
    %54 = arith.addf %44, %53 : vector<8x256xf32>
    %c255_i32 = arith.constant 255 : i32
    %55 = tpu.dynamic_rotate %8 by %c255_i32 dim 1 : vector<8x256xf32>, i32 -> vector<8x256xf32>
    %56 = vector.extract_strided_slice %9 {offsets = [5, 0, 0], sizes = [1, 8, 1], strides = [1, 1, 1]} : vector<9x8x1xf32> to vector<1x8x1xf32>
    %57 = vector.shape_cast %56 : vector<1x8x1xf32> to vector<8x1xf32>
    %58 = vector.broadcast %57 : vector<8x1xf32> to vector<8x256xf32>
    %59 = arith.mulf %55, %58 : vector<8x256xf32>
    %60 = vector.extract_strided_slice %10 {offsets = [5, 0, 0], sizes = [1, 1, 256], strides = [1, 1, 1]} : vector<9x1x256xf32> to vector<1x1x256xf32>
    %61 = vector.shape_cast %60 : vector<1x1x256xf32> to vector<1x256xf32>
    %62 = vector.broadcast %61 : vector<1x256xf32> to vector<8x256xf32>
    %63 = arith.mulf %59, %62 : vector<8x256xf32>
    %64 = arith.addf %54, %63 : vector<8x256xf32>
    %c241_i32 = arith.constant 241 : i32
    %65 = tpu.dynamic_rotate %8 by %c241_i32 dim 1 : vector<8x256xf32>, i32 -> vector<8x256xf32>
    %66 = vector.extract_strided_slice %9 {offsets = [6, 0, 0], sizes = [1, 8, 1], strides = [1, 1, 1]} : vector<9x8x1xf32> to vector<1x8x1xf32>
    %67 = vector.shape_cast %66 : vector<1x8x1xf32> to vector<8x1xf32>
    %68 = vector.broadcast %67 : vector<8x1xf32> to vector<8x256xf32>
    %69 = arith.mulf %65, %68 : vector<8x256xf32>
    %70 = vector.extract_strided_slice %10 {offsets = [6, 0, 0], sizes = [1, 1, 256], strides = [1, 1, 1]} : vector<9x1x256xf32> to vector<1x1x256xf32>
    %71 = vector.shape_cast %70 : vector<1x1x256xf32> to vector<1x256xf32>
    %72 = vector.broadcast %71 : vector<1x256xf32> to vector<8x256xf32>
    %73 = arith.mulf %69, %72 : vector<8x256xf32>
    %74 = arith.addf %64, %73 : vector<8x256xf32>
    %c240_i32 = arith.constant 240 : i32
    %75 = tpu.dynamic_rotate %8 by %c240_i32 dim 1 : vector<8x256xf32>, i32 -> vector<8x256xf32>
    %76 = vector.extract_strided_slice %9 {offsets = [7, 0, 0], sizes = [1, 8, 1], strides = [1, 1, 1]} : vector<9x8x1xf32> to vector<1x8x1xf32>
    %77 = vector.shape_cast %76 : vector<1x8x1xf32> to vector<8x1xf32>
    %78 = vector.broadcast %77 : vector<8x1xf32> to vector<8x256xf32>
    %79 = arith.mulf %75, %78 : vector<8x256xf32>
    %80 = vector.extract_strided_slice %10 {offsets = [7, 0, 0], sizes = [1, 1, 256], strides = [1, 1, 1]} : vector<9x1x256xf32> to vector<1x1x256xf32>
    %81 = vector.shape_cast %80 : vector<1x1x256xf32> to vector<1x256xf32>
    %82 = vector.broadcast %81 : vector<1x256xf32> to vector<8x256xf32>
    %83 = arith.mulf %79, %82 : vector<8x256xf32>
    %84 = arith.addf %74, %83 : vector<8x256xf32>
    %c239_i32 = arith.constant 239 : i32
    %85 = tpu.dynamic_rotate %8 by %c239_i32 dim 1 : vector<8x256xf32>, i32 -> vector<8x256xf32>
    %86 = vector.extract_strided_slice %9 {offsets = [8, 0, 0], sizes = [1, 8, 1], strides = [1, 1, 1]} : vector<9x8x1xf32> to vector<1x8x1xf32>
    %87 = vector.shape_cast %86 : vector<1x8x1xf32> to vector<8x1xf32>
    %88 = vector.broadcast %87 : vector<8x1xf32> to vector<8x256xf32>
    %89 = arith.mulf %85, %88 : vector<8x256xf32>
    %90 = vector.extract_strided_slice %10 {offsets = [8, 0, 0], sizes = [1, 1, 256], strides = [1, 1, 1]} : vector<9x1x256xf32> to vector<1x1x256xf32>
    %91 = vector.shape_cast %90 : vector<1x1x256xf32> to vector<1x256xf32>
    %92 = vector.broadcast %91 : vector<1x256xf32> to vector<8x256xf32>
    %93 = arith.mulf %89, %92 : vector<8x256xf32>
    %94 = arith.addf %84, %93 : vector<8x256xf32>
    %c0_13 = arith.constant 0 : index
    %c0_14 = arith.constant 0 : index
    %95 = vector.load %arg6[%c0_13, %c0_14] : memref<32x8xf32, #tpu.memory_space<vmem>>, vector<32x8xf32>
    %cst_15 = arith.constant dense<0.000000e+00> : vector<32x256xf32>
    %96 = tpu.matmul %95, %94, %cst_15 {dimension_numbers = #tpu.dot_dimension_numbers<[1], [0], [0], [1], [0, 0, 1, 1], [], []>} : vector<32x8xf32>, vector<8x256xf32>, vector<32x256xf32> -> vector<32x256xf32>
    %c0_16 = arith.constant 0 : index
    %c0_17 = arith.constant 0 : index
    %97 = vector.load %arg7[%c0_16, %c0_17] : memref<32x1xf32, #tpu.memory_space<vmem>>, vector<32x1xf32>
    %98 = vector.broadcast %97 : vector<32x1xf32> to vector<32x256xf32>
    %99 = arith.addf %96, %98 : vector<32x256xf32>
    %100 = arith.addf %99, %1 : vector<32x256xf32>
    %cst_18 = arith.constant 0.000000e+00 : f32
    %101 = vector.broadcast %cst_18 : f32 to vector<32x256xf32>
    %102 = arith.maximumf %100, %101 : vector<32x256xf32>
    %c0_19 = arith.constant 0 : index
    %c0_20 = arith.constant 0 : index
    %c0_21 = arith.constant 0 : index
    %103 = vector.load %arg8[%c0_19, %c0_20, %c0_21] : memref<1x32x256xf32, #tpu.memory_space<vmem>>, vector<1x32x256xf32>
    %104 = vector.shape_cast %103 : vector<1x32x256xf32> to vector<32x256xf32>
    %105 = vector.shape_cast %102 : vector<32x256xf32> to vector<1x32x256xf32>
    tpu.vector_store %arg8[%c0_19, %c0_20, %c0_21], %105 {strides = array<i32>} : memref<1x32x256xf32, #tpu.memory_space<vmem>>, vector<1x32x256xf32>,
    return
  }
  func.func @transform_0(%arg0: i32) -> (i32, i32, i32) {
    %c0_i32 = arith.constant 0 : i32
    %c0_i32_0 = arith.constant 0 : i32
    %c0_i32_1 = arith.constant 0 : i32
    return %arg0, %c0_i32, %c0_i32_0 : i32, i32, i32
  }
  func.func @transform_1(%arg0: i32) -> (i32, i32) {
    %c0_i32 = arith.constant 0 : i32
    %c0_i32_0 = arith.constant 0 : i32
    %c0_i32_1 = arith.constant 0 : i32
    return %c0_i32, %c0_i32_0 : i32, i32
  }
  func.func @transform_2(%arg0: i32) -> (i32, i32) {
    %c0_i32 = arith.constant 0 : i32
    %c0_i32_0 = arith.constant 0 : i32
    %c0_i32_1 = arith.constant 0 : i32
    return %c0_i32, %c0_i32_0 : i32, i32
  }
  func.func @transform_3(%arg0: i32) -> (i32, i32, i32) {
    %c0_i32 = arith.constant 0 : i32
    %c0_i32_0 = arith.constant 0 : i32
    %c0_i32_1 = arith.constant 0 : i32
    %c0_i32_2 = arith.constant 0 : i32
    return %c0_i32, %c0_i32_0, %c0_i32_1 : i32, i32, i32
  }
  func.func @transform_4(%arg0: i32) -> (i32, i32, i32) {
    %c0_i32 = arith.constant 0 : i32
    %c0_i32_0 = arith.constant 0 : i32
    %c0_i32_1 = arith.constant 0 : i32
    %c0_i32_2 = arith.constant 0 : i32
    return %c0_i32, %c0_i32_0, %c0_i32_1 : i32, i32, i32
  }
  func.func @transform_5(%arg0: i32) -> (i32, i32) {
    %c0_i32 = arith.constant 0 : i32
    %c0_i32_0 = arith.constant 0 : i32
    %c0_i32_1 = arith.constant 0 : i32
    return %c0_i32, %c0_i32_0 : i32, i32
  }
  func.func @transform_6(%arg0: i32) -> (i32, i32) {
    %c0_i32 = arith.constant 0 : i32
    %c0_i32_0 = arith.constant 0 : i32
    %c0_i32_1 = arith.constant 0 : i32
    return %c0_i32, %c0_i32_0 : i32, i32
  }
  func.func @transform_7(%arg0: i32) -> (i32, i32, i32) {
    %c0_i32 = arith.constant 0 : i32
    %c0_i32_0 = arith.constant 0 : i32
    %c0_i32_1 = arith.constant 0 : i32
    return %arg0, %c0_i32, %c0_i32_0 : i32, i32, i32
  }
}

</mosaic_0001>

<llo_original>
// kernel: tpu_custom_call.1
$region0: #{tpu_custom_call.1}
  #allocation0 [shape = 'u32[]', space=smem, size = 0x4, offset = 0x4, fixed_abs, tag = 'smem constant byte address 0x4 - core index']
  #allocation1 [shape = 'u32[144,128]{1,0:T(1,128)}', space=vmem, size = 0x12000, scoped, tag = 'internal scratch']
  %s0 = inlined_call_operand.vmem [shape: f32[2,32,256], index: 0, kind: input, shape index: {}]
  %s1 = inlined_call_operand.hbm [shape: f32[8,32], index: 1, kind: input, shape index: {}]
  %s2 = inlined_call_operand.vmem [shape: f32[8,1], index: 2, kind: input, shape index: {}]
  %s3 = inlined_call_operand.vmem [shape: f32[9,8,1], index: 3, kind: input, shape index: {}]
  %s4 = inlined_call_operand.vmem [shape: f32[9,1,256], index: 4, kind: input, shape index: {}]
  %s5 = inlined_call_operand.vmem [shape: f32[32,8], index: 5, kind: input, shape index: {}]
  %s6 = inlined_call_operand.vmem [shape: f32[32,1], index: 6, kind: input, shape index: {}]
  %s7 = inlined_call_operand.hbm [shape: f32[2,32,256], index: 7, kind: output, shape index: {}]
  %s8 = sld [smem:[#allocation0]]
  $region65: #{tpu_custom_call.1} parent=0
    _
  %s10 = ssub.s32 1, %s8
  %s11 = scalar_select 0, %s10, %s8
  $region1: #{tpu_custom_call.1} parent=0
    #allocation2 [shape = 'u8[4096]{0}', space=vmem, size = 0x1000, scoped, tag = 'input window, operand 1, single buffered']
    #allocation3 [shape = 's32[2]{0}', space=sflag, size = 0x8, scoped, tag = 'scoped memory for tpu_custom_call.1']
    #allocation4 [shape = 's32[2]{0}', space=sflag, size = 0x8, scoped, tag = 'scoped memory for tpu_custom_call.1']
    #allocation5 [shape = 'u8[65536]{0}', space=vmem, size = 0x10000, scoped, tag = 'output window, operand 0']
    %12 = vsyncpa [#allocation3], 0
    %13 = vsyncpa [#allocation4], 0
    %s14 = scalar_lea.sflag [#allocation4], 1
    %15 = vsyncpa %s14, 0
    loop: start=0, step=1, limit=4
    $region2: #{tpu_custom_call.1} parent=1 // loop_pre_header
      _
    $region3: #{tpu_custom_call.1} parent=1 // loop_header
      %s17 = sphi 0, %s21
      %p18 = scmp.ge.s32.totalorder %s17, 4
      %s27 = sphi 0, %s29
      %s30 = sphi 0, %s27
      %s31 = sphi 0, %s30
      %s47 = sphi 0, %s31
      %s51 = sphi 0, %s51
      %s53 = sphi 0, %s51
      %s54 = sphi 0, %s53
      %s68 = sphi 0, %s54
      %s72 = sphi 0, %s72
      %s74 = sphi 0, %s72
      %s75 = sphi 0, %s74
      %s89 = sphi 0, %s75
      %s93 = sphi 0, %s93
      %s95 = sphi 0, %s93
      %s96 = sphi 0, %s95
      %s110 = sphi 0, %s96
      %s114 = sphi 0, %s114
      %s116 = sphi 0, %s114
      %s117 = sphi 0, %s116
      %s131 = sphi 0, %s117
      %s135 = sphi 0, %s135
      %s137 = sphi 0, %s135
      %s138 = sphi 0, %s137
      %s152 = sphi 0, %s138
      %s156 = sphi 0, %s156
      %s158 = sphi 0, %s156
      %s159 = sphi 0, %s158
      %s173 = sphi 0, %s159
      %s179 = sphi 0, %s181
      %s182 = sphi 0, %s179
      %s183 = sphi 0, %s182
      %s199 = sphi 0, %s183
    $region4: #{tpu_custom_call.1} parent=1 // loop_header_branch
      %20 = sbr.rel (%p18) target = $region8
    $region5: #{tpu_custom_call.1} parent=1 // loop_body
      %s22 = ssub.s32 %s17, 1
      %s23 = ssub.s32 %s17, 2
      %s24 = sadd.s32 %s17, 1
      %s25 = ssub.s32 %s17, %s24
      %p26 = scmp.eq.s32.totalorder %s25, 0
      %s28 = sadd.s32 %s27, 1
      %s29 = scalar_select %p26, %s27, %s28
      %p32 = pneg %p26
      %p33 = scmp.eq.s32.totalorder %s17, 1
      %p34 = por %p32, %p33
      %p35 = scmp.ne.s32.totalorder %s27, %s30
      %p36 = scmp.eq.s32.totalorder %s17, 0
      %p37 = por %p35, %p36
      %p38 = scmp.ne.s32.totalorder %s27, %s30
      %p39 = scmp.eq.s32.totalorder %s22, 1
      %p40 = por %p38, %p39
      %p41 = scmp.ne.s32.totalorder %s30, %s31
      %p42 = scmp.eq.s32.totalorder %s22, 0
      %p43 = por %p41, %p42
      %p44 = scmp.ne.s32.totalorder %s30, %s31
      %p45 = scmp.eq.s32.totalorder %s23, 1
      %p46 = por %p44, %p45
      %p48 = scmp.ne.s32.totalorder %s31, %s47
      %p49 = scmp.eq.s32.totalorder %s23, 0
      %p50 = por %p48, %p49
      %s52 = sadd.s32 %s51, 1
      %p55 = scmp.eq.s32.totalorder %s17, 1
      %p56 = scmp.ne.s32.totalorder %s51, %s53
      %p57 = scmp.eq.s32.totalorder %s17, 0
      %p58 = por %p56, %p57
      %p59 = scmp.ne.s32.totalorder %s51, %s53
      %p60 = scmp.eq.s32.totalorder %s22, 1
      %p61 = por %p59, %p60
      %p62 = scmp.ne.s32.totalorder %s53, %s54
      %p63 = scmp.eq.s32.totalorder %s22, 0
      %p64 = por %p62, %p63
      %p65 = scmp.ne.s32.totalorder %s53, %s54
      %p66 = scmp.eq.s32.totalorder %s23, 1
      %p67 = por %p65, %p66
      %p69 = scmp.ne.s32.totalorder %s54, %s68
      %p70 = scmp.eq.s32.totalorder %s23, 0
      %p71 = por %p69, %p70
      %s73 = sadd.s32 %s72, 1
      %p76 = scmp.eq.s32.totalorder %s17, 1
      %p77 = scmp.ne.s32.totalorder %s72, %s74
      %p78 = scmp.eq.s32.totalorder %s17, 0
      %p79 = por %p77, %p78
      %p80 = scmp.ne.s32.totalorder %s72, %s74
      %p81 = scmp.eq.s32.totalorder %s22, 1
      %p82 = por %p80, %p81
      %p83 = scmp.ne.s32.totalorder %s74, %s75
      %p84 = scmp.eq.s32.totalorder %s22, 0
      %p85 = por %p83, %p84
      %p86 = scmp.ne.s32.totalorder %s74, %s75
      %p87 = scmp.eq.s32.totalorder %s23, 1
      %p88 = por %p86, %p87
      %p90 = scmp.ne.s32.totalorder %s75, %s89
      %p91 = scmp.eq.s32.totalorder %s23, 0
      %p92 = por %p90, %p91
      %s94 = sadd.s32 %s93, 1
      %p97 = scmp.eq.s32.totalorder %s17, 1
      %p98 = scmp.ne.s32.totalorder %s93, %s95
      %p99 = scmp.eq.s32.totalorder %s17, 0
      %p100 = por %p98, %p99
      %p101 = scmp.ne.s32.totalorder %s93, %s95
      %p102 = scmp.eq.s32.totalorder %s22, 1
      %p103 = por %p101, %p102
      %p104 = scmp.ne.s32.totalorder %s95, %s96
      %p105 = scmp.eq.s32.totalorder %s22, 0
      %p106 = por %p104, %p105
      %p107 = scmp.ne.s32.totalorder %s95, %s96
      %p108 = scmp.eq.s32.totalorder %s23, 1
      %p109 = por %p107, %p108
      %p111 = scmp.ne.s32.totalorder %s96, %s110
      %p112 = scmp.eq.s32.totalorder %s23, 0
      %p113 = por %p111, %p112
      %s115 = sadd.s32 %s114, 1
      %p118 = scmp.eq.s32.totalorder %s17, 1
      %p119 = scmp.ne.s32.totalorder %s114, %s116
      %p120 = scmp.eq.s32.totalorder %s17, 0
      %p121 = por %p119, %p120
      %p122 = scmp.ne.s32.totalorder %s114, %s116
      %p123 = scmp.eq.s32.totalorder %s22, 1
      %p124 = por %p122, %p123
      %p125 = scmp.ne.s32.totalorder %s116, %s117
      %p126 = scmp.eq.s32.totalorder %s22, 0
      %p127 = por %p125, %p126
      %p128 = scmp.ne.s32.totalorder %s116, %s117
      %p129 = scmp.eq.s32.totalorder %s23, 1
      %p130 = por %p128, %p129
      %p132 = scmp.ne.s32.totalorder %s117, %s131
      %p133 = scmp.eq.s32.totalorder %s23, 0
      %p134 = por %p132, %p133
      %s136 = sadd.s32 %s135, 1
      %p139 = scmp.eq.s32.totalorder %s17, 1
      %p140 = scmp.ne.s32.totalorder %s135, %s137
      %p141 = scmp.eq.s32.totalorder %s17, 0
      %p142 = por %p140, %p141
      %p143 = scmp.ne.s32.totalorder %s135, %s137
      %p144 = scmp.eq.s32.totalorder %s22, 1
      %p145 = por %p143, %p144
      %p146 = scmp.ne.s32.totalorder %s137, %s138
      %p147 = scmp.eq.s32.totalorder %s22, 0
      %p148 = por %p146, %p147
      %p149 = scmp.ne.s32.totalorder %s137, %s138
      %p150 = scmp.eq.s32.totalorder %s23, 1
      %p151 = por %p149, %p150
      %p153 = scmp.ne.s32.totalorder %s138, %s152
      %p154 = scmp.eq.s32.totalorder %s23, 0
      %p155 = por %p153, %p154
      %s157 = sadd.s32 %s156, 1
      %p160 = scmp.eq.s32.totalorder %s17, 1
      %p161 = scmp.ne.s32.totalorder %s156, %s158
      %p162 = scmp.eq.s32.totalorder %s17, 0
      %p163 = por %p161, %p162
      %p164 = scmp.ne.s32.totalorder %s156, %s158
      %p165 = scmp.eq.s32.totalorder %s22, 1
      %p166 = por %p164, %p165
      %p167 = scmp.ne.s32.totalorder %s158, %s159
      %p168 = scmp.eq.s32.totalorder %s22, 0
      %p169 = por %p167, %p168
      %p170 = scmp.ne.s32.totalorder %s158, %s159
      %p171 = scmp.eq.s32.totalorder %s23, 1
      %p172 = por %p170, %p171
      %p174 = scmp.ne.s32.totalorder %s159, %s173
      %p175 = scmp.eq.s32.totalorder %s23, 0
      %p176 = por %p174, %p175
      %s177 = ssub.s32 %s17, %s24
      %p178 = scmp.eq.s32.totalorder %s177, 0
      %s180 = sadd.s32 %s179, 1
      %s181 = scalar_select %p178, %s179, %s180
      %p184 = pneg %p178
      %p185 = scmp.eq.s32.totalorder %s17, 1
      %p186 = por %p184, %p185
      %p187 = scmp.ne.s32.totalorder %s179, %s182
      %p188 = scmp.eq.s32.totalorder %s17, 0
      %p189 = por %p187, %p188
      %p190 = scmp.ne.s32.totalorder %s179, %s182
      %p191 = scmp.eq.s32.totalorder %s22, 1
      %p192 = por %p190, %p191
      %p193 = scmp.ne.s32.totalorder %s182, %s183
      %p194 = scmp.eq.s32.totalorder %s22, 0
      %p195 = por %p193, %p194
      %p196 = scmp.ne.s32.totalorder %s182, %s183
      %p197 = scmp.eq.s32.totalorder %s23, 1
      %p198 = por %p196, %p197
      %p200 = scmp.ne.s32.totalorder %s183, %s199
      %p201 = scmp.eq.s32.totalorder %s23, 0
      %p202 = por %p200, %p201
      %p203 = scmp.le.s32.totalorder 1, %s17
      %p204 = scmp.lt.s32.totalorder %s17, 3
      %p205 = pnand %p203, %p204
      %p206 = pneg %p205
      // Predicated region
      $region9: #{tpu_custom_call.1} parent=5 // pred_check
        _
      $region10: #{tpu_custom_call.1} parent=5 // pred_check_branch
        %208 = sbr.rel (%p205) target = $region12
      $region11: #{tpu_custom_call.1} parent=5 // pred_region
        %s209 = ssub.s32 %s17, 1
        // Predicated region
        $region13: #{tpu_custom_call.1} parent=11 // pred_check
          %p210 = pneg %p64
        $region14: #{tpu_custom_call.1} parent=11 // pred_check_branch
          %212 = sbr.rel (%p210) target = $region16
        $region15: #{tpu_custom_call.1} parent=11 // pred_region
          %s214 = ssub.s32 128, 128
          %215 = vsyncadd [#allocation3], %s214
          %s217 = sshll.u32 [#allocation2], 4
          %s218 = int_to_ptr.vmem [resolvable:$true] %s217
          %220 = dma.hbm_to_vmem [thread:$0]  %s1, 128, %s218, [#allocation3]
        $region16: #{tpu_custom_call.1} parent=11 // pred_fallthru
          _
        // Predicated region
        $region17: #{tpu_custom_call.1} parent=11 // pred_check
          %p221 = pneg %p85
        $region18: #{tpu_custom_call.1} parent=11 // pred_check_branch
          %223 = sbr.rel (%p221) target = $region20
        $region19: #{tpu_custom_call.1} parent=11 // pred_region
          _
        $region20: #{tpu_custom_call.1} parent=11 // pred_fallthru
          _
        // Predicated region
        $region21: #{tpu_custom_call.1} parent=11 // pred_check
          %p224 = pneg %p106
        $region22: #{tpu_custom_call.1} parent=11 // pred_check_branch
          %226 = sbr.rel (%p224) target = $region24
        $region23: #{tpu_custom_call.1} parent=11 // pred_region
          _
        $region24: #{tpu_custom_call.1} parent=11 // pred_fallthru
          _
        // Predicated region
        $region25: #{tpu_custom_call.1} parent=11 // pred_check
          %p227 = pneg %p127
        $region26: #{tpu_custom_call.1} parent=11 // pred_check_branch
          %229 = sbr.rel (%p227) target = $region28
        $region27: #{tpu_custom_call.1} parent=11 // pred_region
          _
        $region28: #{tpu_custom_call.1} parent=11 // pred_fallthru
          _
        // Predicated region
        $region29: #{tpu_custom_call.1} parent=11 // pred_check
          %p230 = pneg %p148
        $region30: #{tpu_custom_call.1} parent=11 // pred_check_branch
          %232 = sbr.rel (%p230) target = $region32
        $region31: #{tpu_custom_call.1} parent=11 // pred_region
          _
        $region32: #{tpu_custom_call.1} parent=11 // pred_fallthru
          _
        // Predicated region
        $region33: #{tpu_custom_call.1} parent=11 // pred_check
          %p233 = pneg %p169
        $region34: #{tpu_custom_call.1} parent=11 // pred_check_branch
          %235 = sbr.rel (%p233) target = $region36
        $region35: #{tpu_custom_call.1} parent=11 // pred_region
          _
        $region36: #{tpu_custom_call.1} parent=11 // pred_fallthru
          _
      $region12: #{tpu_custom_call.1} parent=5 // pred_fallthru
        _
      %p236 = scmp.lt.s32.totalorder %s17, 2
      // Predicated region
      $region37: #{tpu_custom_call.1} parent=5 // pred_check
        %p237 = pneg %p236
      $region38: #{tpu_custom_call.1} parent=5 // pred_check_branch
        %239 = sbr.rel (%p237) target = $region40
      $region39: #{tpu_custom_call.1} parent=5 // pred_region
        // Predicated region
        $region41: #{tpu_custom_call.1} parent=39 // pred_check
          %p240 = pneg %p37
        $region42: #{tpu_custom_call.1} parent=39 // pred_check_branch
          %242 = sbr.rel (%p240) target = $region44
        $region43: #{tpu_custom_call.1} parent=39 // pred_region
          %p243 = scmp.lt.s32.totalorder %s17, 1
          %s244 = scalar_select %p243, %s17, 1
          %s245 = smul.addr %s244, 8
          %s246 = smul.addr %s245, 8
          %s247 = scalar_lea.vmem %s0, %s246
        $region44: #{tpu_custom_call.1} parent=39 // pred_fallthru
          _
      $region40: #{tpu_custom_call.1} parent=5 // pred_fallthru
        _
      %p248 = scmp.le.s32.totalorder 1, %s17
      %p249 = scmp.lt.s32.totalorder %s17, 3
      %p250 = pnand %p248, %p249
      %p251 = pneg %p250
      // Predicated region
      $region45: #{tpu_custom_call.1} parent=5 // pred_check
        _
      $region46: #{tpu_custom_call.1} parent=5 // pred_check_branch
        %253 = sbr.rel (%p250) target = $region48
      $region47: #{tpu_custom_call.1} parent=5 // pred_region
        %s254 = ssub.s32 %s17, 1
        // Predicated region
        $region49: #{tpu_custom_call.1} parent=47 // pred_check
          %p255 = pneg %p64
        $region50: #{tpu_custom_call.1} parent=47 // pred_check_branch
          %257 = sbr.rel (%p255) target = $region52
        $region51: #{tpu_custom_call.1} parent=47 // pred_region
          %258 = dma.done [#allocation3], 128
        $region52: #{tpu_custom_call.1} parent=47 // pred_fallthru
          _
        %p259 = scmp.lt.s32.totalorder %s22, 1
        %s260 = scalar_select %p259, %s22, 1
        %s261 = smul.addr %s260, 8
        %s262 = smul.addr %s261, 8
        %s263 = scalar_lea.vmem %s0, %s262
        %p264 = pneg %p43
        %p265 = pneg %p40
        %p266 = pneg %p64
        %p267 = pneg %p61
        %p268 = pneg %p85
        %p269 = pneg %p82
        %p270 = pneg %p106
        %p271 = pneg %p103
        %p272 = pneg %p127
        %p273 = pneg %p124
        %p274 = pneg %p148
        %p275 = pneg %p145
        %p276 = pneg %p169
        %p277 = pneg %p166
        %p278 = pneg %p195
        %p279 = pneg %p192
        %s280 = sand.u32 %s182, 1
        %s281 = scalar_lea.sflag [#allocation4], %s280
        %s282 = sand.u32 %s182, 1
        %s283 = smul.addr %s282, 64
        %s284 = scalar_lea.vmem [#allocation5], %s283
        %p285 = scmp.lt.s32.totalorder %s22, 1
        %s286 = scalar_select %p285, %s22, 1
        %s287 = smul.addr %s286, 8
        %s288 = smul.addr %s287, 8
        %s289 = scalar_lea.vmem %s0, %s288
        %v290 = vld [vmem:[%s289] sm:$0xff]
        %v291 = vld [vmem:[%s289 + $0x8] sm:$0xff]
        %v292 = vld [vmem:[%s289 + $0x10] sm:$0xff]
        %v293 = vld [vmem:[%s289 + $0x18] sm:$0xff]
        %v294 = vld [vmem:[%s289 + $0x20] sm:$0xff]
        %v295 = vld [vmem:[%s289 + $0x28] sm:$0xff]
        %v296 = vld [vmem:[%s289 + $0x30] sm:$0xff]
        %v297 = vld [vmem:[%s289 + $0x38] sm:$0xff]
        %v298 = vld [vmem:[#allocation2] sm:$0xff]
        %v299 = vld [vmem:[%s2] sm:$0xff]
        %301 = vset.pattern.permute.xlu0 0
        %302 = vperm.xlu0 %301, %v299
        %v303 = vpop.permute.xlu0 %302
        %vm305 = vcmask 261120
        %v307 = vsel %vm305, %v298, 0
        %309 = vmatprep.subr.mxu0 0.0
        %310 = vmatpush1.msra.mxu0 0.0
        %311 = vmatprep.subr.mxu0 0.0
        %312 = vmatpush1.msra.mxu0 0.0
        %313 = vmatprep.subr.mxu0 0.0
        %314 = vmatpush1.msra.mxu0 0.0
        %315 = vmatprep.subr.mxu0 0.0
        %316 = vmatpush1.msra.mxu0 0.0
        %317 = vmatprep.subr.mxu0 0.0
        %318 = vmatpush1.msra.mxu0 0.0
        %319 = vmatprep.subr.mxu0 0.0
        %320 = vmatpush1.msra.mxu0 0.0
        %321 = vmatprep.subr.mxu0 0.0
        %322 = vmatpush1.msra.mxu0 0.0
        %323 = vmatprep.subr.mxu0 0.0
        %324 = vmatpush1.msra.mxu0 0.0
        %325 = vmatprep.subr.mxu0 0.0
        %326 = vmatpush1.msra.mxu0 0.0
        %327 = vmatprep.subr.mxu0 0.0
        %328 = vmatpush1.msra.mxu0 0.0
        %329 = vmatprep.subr.mxu0 0.0
        %330 = vmatpush1.msra.mxu0 0.0
        %331 = vmatprep.subr.mxu0 0.0
        %332 = vmatpush1.msra.mxu0 0.0
        %333 = vmatprep.subr.mxu0 %v297
        %334 = vmatpush1.msra.mxu0 %v296
        %335 = vmatprep.subr.mxu0 %v295
        %336 = vmatpush1.msra.mxu0 %v294
        %337 = vmatprep.subr.mxu0 %v293
        %338 = vmatpush1.msra.mxu0 %v292
        %339 = vmatprep.subr.mxu0 %v291
        %340 = vmatpush1.msra.mxu0 %v290
        %341 = vmatprep.subr.mxu0 0.0
        %342 = vmatpush2.msra.mxu0 0.0
        %343 = vmatprep.subr.mxu0 0.0
        %344 = vmatpush2.msra.mxu0 0.0
        %345 = vmatprep.subr.mxu0 0.0
        %346 = vmatpush2.msra.mxu0 0.0
        %347 = vmatprep.subr.mxu0 0.0
        %348 = vmatpush2.msra.mxu0 0.0
        %349 = vmatprep.subr.mxu0 0.0
        %350 = vmatpush2.msra.mxu0 0.0
        %351 = vmatprep.subr.mxu0 0.0
        %352 = vmatpush2.msra.mxu0 0.0
        %353 = vmatprep.subr.mxu0 0.0
        %354 = vmatpush2.msra.mxu0 0.0
        %355 = vmatprep.subr.mxu0 0.0
        %356 = vmatpush2.msra.mxu0 0.0
        %357 = vmatprep.subr.mxu0 0.0
        %358 = vmatpush2.msra.mxu0 0.0
        %359 = vmatprep.subr.mxu0 0.0
        %360 = vmatpush2.msra.mxu0 0.0
        %361 = vmatprep.subr.mxu0 0.0
        %362 = vmatpush2.msra.mxu0 0.0
        %363 = vmatprep.subr.mxu0 0.0
        %364 = vmatpush2.msra.mxu0 0.0
        %365 = vmatprep.subr.mxu0 0.0
        %366 = vmatpush2.msra.mxu0 0.0
        %367 = vmatprep.subr.mxu0 0.0
        %368 = vmatpush2.msra.mxu0 0.0
        %369 = vmatprep.subr.mxu0 0.0
        %370 = vmatpush2.msra.mxu0 0.0
        %371 = vmatprep.subr.mxu0 0.0
        %372 = vmatpush2.msra.mxu0 0.0
        %373 = vmatprep.mubr.f32.mxu0 0.0
        %374 = vmatmul.mubr.f32.gmra.mxu0 %v307
        %v375 = vpop.f32.mrf.mxu0
        %v376 = vadd.f32 %v303, %v375
        %v377 = vpop.f32.mrf.mxu0
        %v378 = vadd.f32 %v303, %v377
        %379 = vdwg.mxu0
        %v380 = vmax.f32 %v376, 0.0
        %v381 = vmax.f32 %v378, 0.0
        %v382 = vld [vmem:[%s3] sm:$0xff]
        %v383 = vld [vmem:[%s3 + $0x8] sm:$0xff]
        %v384 = vld [vmem:[%s3 + $0x10] sm:$0xff]
        %v385 = vld [vmem:[%s3 + $0x18] sm:$0xff]
        %v386 = vld [vmem:[%s3 + $0x20] sm:$0xff]
        %v387 = vld [vmem:[%s3 + $0x28] sm:$0xff]
        %v388 = vld [vmem:[%s3 + $0x30] sm:$0xff]
        %v389 = vld [vmem:[%s3 + $0x38] sm:$0xff]
        %v390 = vld [vmem:[%s3 + $0x40] sm:$0xff]
        %v391 = vld [vmem:[%s4] sm:$0x3]
        %v392 = vld [vmem:[%s4 + $0x2] sm:$0x3]
        %v393 = vld [vmem:[%s4 + $0x4] sm:$0x3]
        %v394 = vld [vmem:[%s4 + $0x6] sm:$0x3]
        %v395 = vld [vmem:[%s4 + $0xa] sm:$0x3]
        %v396 = vld [vmem:[%s4 + $0xc] sm:$0x3]
        %v397 = vld [vmem:[%s4 + $0xe] sm:$0x3]
        %v398 = vld [vmem:[%s4 + $0x10] sm:$0x3]
        %400 = vset.pattern.permute.xlu0 0
        %401 = vperm.xlu0 %400, %v386
        %v402 = vpop.permute.xlu0 %401
        %v404 = vmul.f32 %v380, %v402
        %v405 = vmul.f32 %v381, %v402
        %406 = vrot.lane.b32.xlu0 %v380, 17
        %v407 = vpop.permute.xlu0 %406
        %408 = vrot.lane.b32.xlu0 %v381, 17
        %v409 = vpop.permute.xlu0 %408
        %v410 = vlaneseq
        %v411 = vand.u32 %v410, 127
        %vm412 = vcmp.lt.s32.totalorder %v411, 17
        %v413 = vsel %vm412, %v407, %v409
        %v414 = vsel %vm412, %v409, %v407
        %416 = vset.pattern.permute.xlu0 0
        %417 = vperm.xlu0 %416, %v382
        %v418 = vpop.permute.xlu0 %417
        %v420 = vmul.f32 %v414, %v418
        %v421 = vmul.f32 %v413, %v418
        %v423 = vlaneseq
        %v424 = vshrl.u32 %v423, 7
        %v425 = vsub.s32 0, %v424
        %v426 = vrot.slane %v391, %v425
        %v427 = vlaneseq
        %v428 = vshrl.u32 %v427, 7
        %v429 = vsub.s32 1, %v428
        %v430 = vrot.slane %v391, %v429
        %v433 = vmul.f32 %v420, %v426
        %v434 = vmul.f32 %v421, %v430
        %v435 = vadd.f32 %v404, %v433
        %v436 = vadd.f32 %v405, %v434
        %437 = vrot.lane.b32.xlu0 %v380, 16
        %v438 = vpop.permute.xlu0 %437
        %439 = vrot.lane.b32.xlu0 %v381, 16
        %v440 = vpop.permute.xlu0 %439
        %vm441 = vcmp.lt.s32.totalorder %v411, 16
        %v442 = vsel %vm441, %v438, %v440
        %v443 = vsel %vm441, %v440, %v438
        %445 = vset.pattern.permute.xlu0 0
        %446 = vperm.xlu0 %445, %v383
        %v447 = vpop.permute.xlu0 %446
        %v449 = vmul.f32 %v443, %v447
        %v450 = vmul.f32 %v442, %v447
        %v452 = vlaneseq
        %v453 = vshrl.u32 %v452, 7
        %v454 = vsub.s32 0, %v453
        %v455 = vrot.slane %v392, %v454
        %v456 = vlaneseq
        %v457 = vshrl.u32 %v456, 7
        %v458 = vsub.s32 1, %v457
        %v459 = vrot.slane %v392, %v458
        %v462 = vmul.f32 %v449, %v455
        %v463 = vmul.f32 %v450, %v459
        %v464 = vadd.f32 %v435, %v462
        %v465 = vadd.f32 %v436, %v463
        %466 = vrot.lane.b32.xlu0 %v380, 15
        %v467 = vpop.permute.xlu0 %466
        %468 = vrot.lane.b32.xlu0 %v381, 15
        %v469 = vpop.permute.xlu0 %468
        %vm470 = vcmp.lt.s32.totalorder %v411, 15
        %v471 = vsel %vm470, %v467, %v469
        %v472 = vsel %vm470, %v469, %v467
        %474 = vset.pattern.permute.xlu0 0
        %475 = vperm.xlu0 %474, %v384
        %v476 = vpop.permute.xlu0 %475
        %v478 = vmul.f32 %v472, %v476
        %v479 = vmul.f32 %v471, %v476
        %v481 = vlaneseq
        %v482 = vshrl.u32 %v481, 7
        %v483 = vsub.s32 0, %v482
        %v484 = vrot.slane %v393, %v483
        %v485 = vlaneseq
        %v486 = vshrl.u32 %v485, 7
        %v487 = vsub.s32 1, %v486
        %v488 = vrot.slane %v393, %v487
        %v491 = vmul.f32 %v478, %v484
        %v492 = vmul.f32 %v479, %v488
        %v493 = vadd.f32 %v464, %v491
        %v494 = vadd.f32 %v465, %v492
        %495 = vrot.lane.b32.xlu0 %v380, 1
        %v496 = vpop.permute.xlu0 %495
        %497 = vrot.lane.b32.xlu0 %v381, 1
        %v498 = vpop.permute.xlu0 %497
        %vm499 = vcmp.lt.s32.totalorder %v411, 1
        %v500 = vsel %vm499, %v496, %v498
        %v501 = vsel %vm499, %v498, %v496
        %503 = vset.pattern.permute.xlu0 0
        %504 = vperm.xlu0 %503, %v385
        %v505 = vpop.permute.xlu0 %504
        %v507 = vmul.f32 %v501, %v505
        %v508 = vmul.f32 %v500, %v505
        %v510 = vlaneseq
        %v511 = vshrl.u32 %v510, 7
        %v512 = vsub.s32 0, %v511
        %v513 = vrot.slane %v394, %v512
        %v514 = vlaneseq
        %v515 = vshrl.u32 %v514, 7
        %v516 = vsub.s32 1, %v515
        %v517 = vrot.slane %v394, %v516
        %v520 = vmul.f32 %v507, %v513
        %v521 = vmul.f32 %v508, %v517
        %v522 = vadd.f32 %v493, %v520
        %v523 = vadd.f32 %v494, %v521
        %524 = vrot.lane.b32.xlu0 %v380, 127
        %v525 = vpop.permute.xlu0 %524
        %526 = vrot.lane.b32.xlu0 %v381, 127
        %v527 = vpop.permute.xlu0 %526
        %vm528 = vcmp.lt.s32.totalorder %v411, 127
        %v529 = vsel %vm528, %v525, %v527
        %v530 = vsel %vm528, %v527, %v525
        %532 = vset.pattern.permute.xlu0 0
        %533 = vperm.xlu0 %532, %v387
        %v534 = vpop.permute.xlu0 %533
        %v536 = vmul.f32 %v529, %v534
        %v537 = vmul.f32 %v530, %v534
        %v539 = vlaneseq
        %v540 = vshrl.u32 %v539, 7
        %v541 = vsub.s32 0, %v540
        %v542 = vrot.slane %v395, %v541
        %v543 = vlaneseq
        %v544 = vshrl.u32 %v543, 7
        %v545 = vsub.s32 1, %v544
        %v546 = vrot.slane %v395, %v545
        %v549 = vmul.f32 %v536, %v542
        %v550 = vmul.f32 %v537, %v546
        %v551 = vadd.f32 %v522, %v549
        %v552 = vadd.f32 %v523, %v550
        %553 = vrot.lane.b32.xlu0 %v380, 113
        %v554 = vpop.permute.xlu0 %553
        %555 = vrot.lane.b32.xlu0 %v381, 113
        %v556 = vpop.permute.xlu0 %555
        %vm557 = vcmp.lt.s32.totalorder %v411, 113
        %v558 = vsel %vm557, %v554, %v556
        %v559 = vsel %vm557, %v556, %v554
        %561 = vset.pattern.permute.xlu0 0
        %562 = vperm.xlu0 %561, %v388
        %v563 = vpop.permute.xlu0 %562
        %v565 = vmul.f32 %v558, %v563
        %v566 = vmul.f32 %v559, %v563
        %v568 = vlaneseq
        %v569 = vshrl.u32 %v568, 7
        %v570 = vsub.s32 0, %v569
        %v571 = vrot.slane %v396, %v570
        %v572 = vlaneseq
        %v573 = vshrl.u32 %v572, 7
        %v574 = vsub.s32 1, %v573
        %v575 = vrot.slane %v396, %v574
        %v578 = vmul.f32 %v565, %v571
        %v579 = vmul.f32 %v566, %v575
        %v580 = vadd.f32 %v551, %v578
        %v581 = vadd.f32 %v552, %v579
        %582 = vrot.lane.b32.xlu0 %v380, 112
        %v583 = vpop.permute.xlu0 %582
        %584 = vrot.lane.b32.xlu0 %v381, 112
        %v585 = vpop.permute.xlu0 %584
        %vm586 = vcmp.lt.s32.totalorder %v411, 112
        %v587 = vsel %vm586, %v583, %v585
        %v588 = vsel %vm586, %v585, %v583
        %590 = vset.pattern.permute.xlu0 0
        %591 = vperm.xlu0 %590, %v389
        %v592 = vpop.permute.xlu0 %591
        %v594 = vmul.f32 %v587, %v592
        %v595 = vmul.f32 %v588, %v592
        %v597 = vlaneseq
        %v598 = vshrl.u32 %v597, 7
        %v599 = vsub.s32 0, %v598
        %v600 = vrot.slane %v397, %v599
        %v601 = vlaneseq
        %v602 = vshrl.u32 %v601, 7
        %v603 = vsub.s32 1, %v602
        %v604 = vrot.slane %v397, %v603
        %v607 = vmul.f32 %v594, %v600
        %v608 = vmul.f32 %v595, %v604
        %v609 = vadd.f32 %v580, %v607
        %v610 = vadd.f32 %v581, %v608
        %611 = vrot.lane.b32.xlu0 %v380, 111
        %v612 = vpop.permute.xlu0 %611
        %613 = vrot.lane.b32.xlu0 %v381, 111
        %v614 = vpop.permute.xlu0 %613
        %vm615 = vcmp.lt.s32.totalorder %v411, 111
        %v616 = vsel %vm615, %v612, %v614
        %v617 = vsel %vm615, %v614, %v612
        %619 = vset.pattern.permute.xlu0 0
        %620 = vperm.xlu0 %619, %v390
        %v621 = vpop.permute.xlu0 %620
        %v623 = vmul.f32 %v616, %v621
        %v624 = vmul.f32 %v617, %v621
        %v626 = vlaneseq
        %v627 = vshrl.u32 %v626, 7
        %v628 = vsub.s32 0, %v627
        %v629 = vrot.slane %v398, %v628
        %v630 = vlaneseq
        %v631 = vshrl.u32 %v630, 7
        %v632 = vsub.s32 1, %v631
        %v633 = vrot.slane %v398, %v632
        %v636 = vmul.f32 %v623, %v629
        %v637 = vmul.f32 %v624, %v633
        %v638 = vadd.f32 %v609, %v636
        %v639 = vadd.f32 %v610, %v637
        %v640 = vld [vmem:[%s5] sm:$0xff]
        %v641 = vld [vmem:[%s5 + $0x8] sm:$0xff]
        %v642 = vld [vmem:[%s5 + $0x10] sm:$0xff]
        %v643 = vld [vmem:[%s5 + $0x18] sm:$0xff]
        %v644 = vld [vmem:[%s6] sm:$0xff]
        %v645 = vld [vmem:[%s6 + $0x8] sm:$0xff]
        %v646 = vld [vmem:[%s6 + $0x10] sm:$0xff]
        %v647 = vld [vmem:[%s6 + $0x18] sm:$0xff]
        %649 = vset.pattern.permute.xlu0 0
        %650 = vperm.xlu0 %649, %v644
        %v651 = vpop.permute.xlu0 %650
        %654 = vset.pattern.permute.xlu0 0
        %655 = vperm.xlu0 %654, %v645
        %v656 = vpop.permute.xlu0 %655
        %659 = vset.pattern.permute.xlu0 0
        %660 = vperm.xlu0 %659, %v646
        %v661 = vpop.permute.xlu0 %660
        %664 = vset.pattern.permute.xlu0 0
        %665 = vperm.xlu0 %664, %v647
        %v666 = vpop.permute.xlu0 %665
        %vm668 = vcmask 64512
        %v670 = vsel %vm668, %v640, 0
        %v673 = vsel %vm668, %v641, 0
        %v676 = vsel %vm668, %v642, 0
        %v679 = vsel %vm668, %v643, 0
        %681 = vmatprep.subr.mxu0 0.0
        %682 = vmatpush1.msra.mxu0 0.0
        %683 = vmatprep.subr.mxu0 0.0
        %684 = vmatpush1.msra.mxu0 0.0
        %685 = vmatprep.subr.mxu0 0.0
        %686 = vmatpush1.msra.mxu0 0.0
        %687 = vmatprep.subr.mxu0 0.0
        %688 = vmatpush1.msra.mxu0 0.0
        %689 = vmatprep.subr.mxu0 0.0
        %690 = vmatpush1.msra.mxu0 0.0
        %691 = vmatprep.subr.mxu0 0.0
        %692 = vmatpush1.msra.mxu0 0.0
        %693 = vmatprep.subr.mxu0 0.0
        %694 = vmatpush1.msra.mxu0 0.0
        %695 = vmatprep.subr.mxu0 0.0
        %696 = vmatpush1.msra.mxu0 0.0
        %697 = vmatprep.subr.mxu0 0.0
        %698 = vmatpush1.msra.mxu0 0.0
        %699 = vmatprep.subr.mxu0 0.0
        %700 = vmatpush1.msra.mxu0 0.0
        %701 = vmatprep.subr.mxu0 0.0
        %702 = vmatpush1.msra.mxu0 0.0
        %703 = vmatprep.subr.mxu0 0.0
        %704 = vmatpush1.msra.mxu0 0.0
        %705 = vmatprep.subr.mxu0 0.0
        %706 = vmatpush1.msra.mxu0 0.0
        %707 = vmatprep.subr.mxu0 0.0
        %708 = vmatpush1.msra.mxu0 0.0
        %709 = vmatprep.subr.mxu0 0.0
        %710 = vmatpush1.msra.mxu0 0.0
        %711 = vmatprep.subr.mxu0 %v639
        %712 = vmatpush1.msra.mxu0 %v638
        %713 = vmatprep.subr.mxu0 0.0
        %714 = vmatpush2.msra.mxu0 0.0
        %715 = vmatprep.subr.mxu0 0.0
        %716 = vmatpush2.msra.mxu0 0.0
        %717 = vmatprep.subr.mxu0 0.0
        %718 = vmatpush2.msra.mxu0 0.0
        %719 = vmatprep.subr.mxu0 0.0
        %720 = vmatpush2.msra.mxu0 0.0
        %721 = vmatprep.subr.mxu0 0.0
        %722 = vmatpush2.msra.mxu0 0.0
        %723 = vmatprep.subr.mxu0 0.0
        %724 = vmatpush2.msra.mxu0 0.0
        %725 = vmatprep.subr.mxu0 0.0
        %726 = vmatpush2.msra.mxu0 0.0
        %727 = vmatprep.subr.mxu0 0.0
        %728 = vmatpush2.msra.mxu0 0.0
        %729 = vmatprep.subr.mxu0 0.0
        %730 = vmatpush2.msra.mxu0 0.0
        %731 = vmatprep.subr.mxu0 0.0
        %732 = vmatpush2.msra.mxu0 0.0
        %733 = vmatprep.subr.mxu0 0.0
        %734 = vmatpush2.msra.mxu0 0.0
        %735 = vmatprep.subr.mxu0 0.0
        %736 = vmatpush2.msra.mxu0 0.0
        %737 = vmatprep.subr.mxu0 0.0
        %738 = vmatpush2.msra.mxu0 0.0
        %739 = vmatprep.subr.mxu0 0.0
        %740 = vmatpush2.msra.mxu0 0.0
        %741 = vmatprep.subr.mxu0 0.0
        %742 = vmatpush2.msra.mxu0 0.0
        %743 = vmatprep.subr.mxu0 0.0
        %744 = vmatpush2.msra.mxu0 0.0
        %745 = vmatprep.mubr.f32.mxu0 0.0
        %746 = vmatmul.mubr.f32.gmra.mxu0 %v670
        %v747 = vpop.f32.mrf.mxu0
        %v748 = vadd.f32 %v651, %v747
        %v749 = vpop.f32.mrf.mxu0
        %v750 = vadd.f32 %v651, %v749
        %751 = vmatprep.mubr.f32.mxu0 0.0
        %752 = vmatmul.mubr.f32.gmra.mxu0 %v673
        %v753 = vpop.f32.mrf.mxu0
        %v754 = vadd.f32 %v656, %v753
        %v755 = vpop.f32.mrf.mxu0
        %v756 = vadd.f32 %v656, %v755
        %757 = vmatprep.mubr.f32.mxu0 0.0
        %758 = vmatmul.mubr.f32.gmra.mxu0 %v676
        %v759 = vpop.f32.mrf.mxu0
        %v760 = vadd.f32 %v661, %v759
        %v761 = vpop.f32.mrf.mxu0
        %v762 = vadd.f32 %v661, %v761
        %763 = vmatprep.mubr.f32.mxu0 0.0
        %764 = vmatmul.mubr.f32.gmra.mxu0 %v679
        %v765 = vpop.f32.mrf.mxu0
        %v766 = vadd.f32 %v666, %v765
        %v767 = vpop.f32.mrf.mxu0
        %v768 = vadd.f32 %v666, %v767
        %769 = vdwg.mxu0
        %v770 = vadd.f32 %v748, %v290
        %v771 = vadd.f32 %v750, %v291
        %v772 = vadd.f32 %v754, %v292
        %v773 = vadd.f32 %v756, %v293
        %v774 = vadd.f32 %v760, %v294
        %v775 = vadd.f32 %v762, %v295
        %v776 = vadd.f32 %v766, %v296
        %v777 = vadd.f32 %v768, %v297
        %v778 = vmax.f32 %v770, 0.0
        %v779 = vmax.f32 %v771, 0.0
        %v780 = vmax.f32 %v772, 0.0
        %v781 = vmax.f32 %v773, 0.0
        %v782 = vmax.f32 %v774, 0.0
        %v783 = vmax.f32 %v775, 0.0
        %v784 = vmax.f32 %v776, 0.0
        %v785 = vmax.f32 %v777, 0.0
        %786 = vst [vmem:[%s284] sm:$0xff] %v778
        %787 = vst [vmem:[%s284 + $0x8] sm:$0xff] %v779
        %788 = vst [vmem:[%s284 + $0x10] sm:$0xff] %v780
        %789 = vst [vmem:[%s284 + $0x18] sm:$0xff] %v781
        %790 = vst [vmem:[%s284 + $0x20] sm:$0xff] %v782
        %791 = vst [vmem:[%s284 + $0x28] sm:$0xff] %v783
        %792 = vst [vmem:[%s284 + $0x30] sm:$0xff] %v784
        %793 = vst [vmem:[%s284 + $0x38] sm:$0xff] %v785
        %s794 = sand.u32 %s182, 1
        %s795 = scalar_lea.sflag [#allocation4], %s794
        %s796 = sand.u32 %s182, 1
        %s797 = smul.addr %s796, 64
        %s798 = scalar_lea.vmem [#allocation5], %s797
        // Predicated region
        $region53: #{tpu_custom_call.1} parent=47 // pred_check
          %p799 = pneg %p192
        $region54: #{tpu_custom_call.1} parent=47 // pred_check_branch
          %801 = sbr.rel (%p799) target = $region56
        $region55: #{tpu_custom_call.1} parent=47 // pred_region
          %s803 = ssub.s32 1024, 1024
          %804 = vsyncadd %s795, %s803
          %s805 = smul.addr %s22, 8
          %s806 = smul.addr %s805, 128
          %s807 = scalar_lea.hbm %s7, %s806
          %s808 = sshll.u32 %s798, 4
          %s809 = int_to_ptr.vmem [resolvable:$true] %s808
          %814 = dma.vmem_to_hbm [thread:$0]  %s809, 1024, %s807, %s795, 256, 256, 16
        $region56: #{tpu_custom_call.1} parent=47 // pred_fallthru
          _
      $region48: #{tpu_custom_call.1} parent=5 // pred_fallthru
        _
      %p815 = scmp.le.s32.totalorder 2, %s17
      // Predicated region
      $region57: #{tpu_custom_call.1} parent=5 // pred_check
        %p816 = pneg %p815
      $region58: #{tpu_custom_call.1} parent=5 // pred_check_branch
        %818 = sbr.rel (%p816) target = $region60
      $region59: #{tpu_custom_call.1} parent=5 // pred_region
        %s819 = ssub.s32 %s17, 2
        // Predicated region
        $region61: #{tpu_custom_call.1} parent=59 // pred_check
          %p820 = pneg %p198
        $region62: #{tpu_custom_call.1} parent=59 // pred_check_branch
          %822 = sbr.rel (%p820) target = $region64
        $region63: #{tpu_custom_call.1} parent=59 // pred_region
          %s823 = sand.u32 %s183, 1
          %s824 = scalar_lea.sflag [#allocation4], %s823
          %s825 = sand.u32 %s183, 1
          %s826 = smul.addr %s825, 64
          %s827 = scalar_lea.vmem [#allocation5], %s826
          %828 = dma.done %s824, 1024
        $region64: #{tpu_custom_call.1} parent=59 // pred_fallthru
          _
      $region60: #{tpu_custom_call.1} parent=5 // pred_fallthru
        _
    $region6: #{tpu_custom_call.1} parent=1 // loop_footer
      %s21 = sadd.s32 1, %s17
    $region7: #{tpu_custom_call.1} parent=1 // loop_footer_branch
      %16 = sbr.rel target = $region3
    $region8: #{tpu_custom_call.1} parent=1 // loop_exit
      _
    %829 = vsyncpa [#allocation3], 1
    %s830 = scalar_lea.sflag [#allocation3], 1
    %831 = vsyncpa %s830, 1
    %832 = vsyncpa [#allocation4], 1
    %s833 = scalar_lea.sflag [#allocation4], 1
    %834 = vsyncpa %s833, 1

</llo_original>
